<compile_context>
chip_gen: v6e
topology: v6e:2x2x1
jax: 0.10.0
libtpu: 0.0.40
codegen_flags: <defaults>
</compile_context>

<pallas_src>
import numpy as np
import jax
import jax.numpy as jnp
from jax import lax
from jax.experimental import pallas as pl
from jax.experimental.pallas import tpu as pltpu

NUM_QUBITS = 4
DIM = 2 ** NUM_QUBITS  # 16


# ----------------------------- Pallas kernel --------------------------------
def hybrid_qnl_kernel(x_ref, w2_ref, b2_ref, m_ref, bout_ref, o_ref):
    x = x_ref[...]                                                # (4, TB) batch on lanes

    # fc2: h = W2 @ x + b2     (W2 is (out, in) = (4, 4), b2 is (4, 1))
    h = jnp.dot(w2_ref[...], x, preferred_element_type=jnp.float32) + b2_ref[...]

    # ---- surrogate quantum layer: 4-qubit statevector ----
    # RY(h_q)|0> = [cos(h_q/2), sin(h_q/2)] per qubit; product-state amplitudes
    # psi[k, b] = prod_q (sin if bit_q(k) else cos)   with qubit 0 = MSB of k.
    c = jnp.cos(0.5 * h)                                          # (4, TB)
    s = jnp.sin(0.5 * h)                                          # (4, TB)
    tb = x.shape[1]

    basis = lax.broadcasted_iota(jnp.int32, (DIM, tb), 0)         # basis index per row
    facs = []
    for q in range(NUM_QUBITS):                                   # 4 selects total
        bit = (basis >> (NUM_QUBITS - 1 - q)) & 1
        facs.append(jnp.where(bit == 1, s[q:q + 1, :], c[q:q + 1, :]))
    psi = (facs[0] * facs[1]) * (facs[2] * facs[3])               # (16, TB), 3 muls

    # folded observable: M = wout * U^T diag(Z0) U  (symmetric, built on host)
    # y_pre = psi^T M psi  (per batch column)  == wout * <Z_0>
    mpsi = jnp.dot(m_ref[...], psi, preferred_element_type=jnp.float32)   # (16, TB) MXU
    expz = jnp.sum(psi * mpsi, axis=0, keepdims=True)             # (1, TB)

    # output_layer bias (weight already folded into M)
    y = expz + bout_ref[0]                                        # (1, TB)

    # cat((y, 1 - y), -1)  -> rows [y ; 1 - y] in (feature, batch) layout
    row = lax.broadcasted_iota(jnp.int32, (2, tb), 0)
    o_ref[...] = jnp.where(row == 0, y, 1.0 - y)                  # (2, TB)


# ----------------------------- host wrapper ----------------------------------
def hybrid_forward(x, w2, b2, m, bout, *, tb=2048):
    """x: (B, 4) float32.  Returns (B, 2) float32."""
    B = x.shape[0]
    xt = x.T                                                       # (4, B) batch on lanes

    if B <= tb:
        tb_eff, b_pad = B, B                                       # single tile == full dim
    else:
        tb_eff = tb                                                # multiple of 128
        b_pad = pl.cdiv(B, tb) * tb
        if b_pad != B:
            xt = jnp.pad(xt, ((0, 0), (0, b_pad - B)))

    out_t = pl.pallas_call(
        hybrid_qnl_kernel,
        out_shape=jax.ShapeDtypeStruct((2, b_pad), jnp.float32),
        grid=(b_pad // tb_eff,),
        in_specs=[
            pl.BlockSpec((4, tb_eff), lambda i: (0, i)),           # x tile (batch on lanes)
            pl.BlockSpec((4, 4), lambda i: (0, 0)),                # fc2 weight, resident
            pl.BlockSpec((4, 1), lambda i: (0, 0)),                # fc2 bias, resident
            pl.BlockSpec((DIM, DIM), lambda i: (0, 0)),            # folded 16x16 matrix, resident
            pl.BlockSpec(memory_space=pltpu.MemorySpace.SMEM),     # output bias scalar
        ],
        out_specs=pl.BlockSpec((2, tb_eff), lambda i: (0, i)),
        compiler_params=pltpu.CompilerParams(
            dimension_semantics=("parallel",)),                    # megacore on v7x
    )(xt, w2, b2, m, bout)

    return out_t[:, :B].T                                          # (B, 2)


# ------------------- deterministic parameter construction --------------------
def _ry(theta):
    ct, st = np.cos(theta / 2.0), np.sin(theta / 2.0)
    return np.array([[ct, -st], [st, ct]], dtype=np.float64)


def _single(q, gate):
    mats = [np.eye(2) for _ in range(NUM_QUBITS)]
    mats[q] = gate
    out = mats[0]
    for mm in mats[1:]:
        out = np.kron(out, mm)
    return out


def _cnot(ctrl, tgt):
    M = np.zeros((DIM, DIM), dtype=np.float64)
    for k in range(DIM):
        if (k >> (NUM_QUBITS - 1 - ctrl)) & 1:
            j = k ^ (1 << (NUM_QUBITS - 1 - tgt))
        else:
            j = k
        M[j, k] = 1.0
    return M


def build_ansatz_unitary(weights):
    """weights: (layers, NUM_QUBITS) rotation angles -> 16x16 real unitary."""
    U = np.eye(DIM)
    for layer in range(weights.shape[0]):
        for q in range(NUM_QUBITS):
            U = _single(q, _ry(float(weights[layer, q]))) @ U
        for (cq, tq) in [(0, 1), (1, 2), (2, 3), (3, 0)]:
            U = _cnot(cq, tq) @ U
    return U


def make_params(key):
    k1, k2, k3, k4, k5 = jax.random.split(key, 5)
    # fc2: Linear(4, 4) -> weight (out, in), bias as column (out, 1)
    w2 = jax.random.uniform(k1, (4, 4), jnp.float32, -0.5, 0.5)
    b2 = jax.random.uniform(k2, (4, 1), jnp.float32, -0.5, 0.5)
    # quantum ansatz weights (2 layers of RY per qubit) -> 16x16 unitary
    qw = np.asarray(jax.random.uniform(k3, (2, NUM_QUBITS), jnp.float32, -np.pi, np.pi))
    U = build_ansatz_unitary(qw)
    # Z on qubit 0 (MSB of basis index)
    z0 = np.array([1.0 - 2.0 * ((k >> (NUM_QUBITS - 1)) & 1) for k in range(DIM)])
    # output_layer: Linear(1, 1) -> fold weight into observable matrix
    wout = float(jax.random.uniform(k4, (), jnp.float32, -1.0, 1.0))
    bout = jax.random.uniform(k5, (1,), jnp.float32, -1.0, 1.0)
    M = (U.T @ np.diag(z0) @ U) * wout                             # symmetric 16x16
    return w2, b2, jnp.asarray(M, dtype=jnp.float32), bout


# ----------------------------- pure-JAX reference ----------------------------
def reference_forward(x, w2, b2, m, bout):
    h = x @ w2.T + b2[:, 0]                                        # (B, 4)
    c = jnp.cos(0.5 * h)
    s = jnp.sin(0.5 * h)
    ks = jnp.arange(DIM)
    qs = jnp.arange(NUM_QUBITS)
    bits = (ks[:, None] >> (NUM_QUBITS - 1 - qs)[None, :]) & 1     # (16, 4)
    fac = jnp.where(bits[None, :, :] == 1, s[:, None, :], c[:, None, :])  # (B, 16, 4)
    psi = jnp.prod(fac, axis=-1)                                   # (B, 16)
    expz = jnp.sum(psi * (psi @ m), axis=-1, keepdims=True)        # (B, 1), m symmetric
    y = expz + bout[0]
    return jnp.concatenate([y, 1.0 - y], axis=-1)                  # (B, 2)


if __name__ == "__main__":
    key = jax.random.PRNGKey(0)
    kx, kp = jax.random.split(key)

    B = 8
    x = jax.random.normal(kx, (B, 4), dtype=jnp.float32)           # (batch, 4) PCA features
    w2, b2, m, bout = make_params(kp)

    out = jax.block_until_ready(hybrid_forward(x, w2, b2, m, bout))
    ref = reference_forward(x, w2, b2, m, bout)

    assert out.shape == (B, 2), out.shape
    assert bool(jnp.all(jnp.isfinite(out)))
    # rows satisfy out[:,0] + out[:,1] == 1 by construction of cat((y, 1-y))
    assert bool(jnp.allclose(out[:, 0] + out[:, 1], 1.0, atol=1e-5))
    assert bool(jnp.allclose(out, ref, atol=1e-4, rtol=1e-4))
    print("KERNEL_OK")
</pallas_src>

<mosaic_0001>
module attributes {stable_mosaic.version = 11 : i64} {
  func.func @hybrid_qnl_kernel(%arg0: i32, %arg1: memref<4x8xf32, #tpu.memory_space<vmem>>, %arg2: memref<4x4xf32, #tpu.memory_space<vmem>>, %arg3: memref<4x1xf32, #tpu.memory_space<vmem>>, %arg4: memref<16x16xf32, #tpu.memory_space<vmem>>, %arg5: memref<1xf32, #tpu.memory_space<smem>>, %arg6: memref<2x8xf32, #tpu.memory_space<vmem>>) attributes {dimension_semantics = [#tpu.dimension_semantics<parallel>], iteration_bounds = array<i64: 1>, scalar_prefetch = 0 : i64, scratch_operands = 0 : i64, tpu.core_type = #tpu.core_type<tc>, window_params = [{transform_indices = @transform_0, window_bounds = array<i64: 4, 8>}, {pipeline_mode = #tpu.pipeline_mode<synchronous>, transform_indices = @transform_1, window_bounds = array<i64: 4, 4>}, {pipeline_mode = #tpu.pipeline_mode<synchronous>, transform_indices = @transform_2, window_bounds = array<i64: 4, 1>}, {pipeline_mode = #tpu.pipeline_mode<synchronous>, transform_indices = @transform_3, window_bounds = array<i64: 16, 16>}, {transform_indices = @transform_4, window_bounds = array<i64: 1>}, {transform_indices = @transform_5, window_bounds = array<i64: 2, 8>}]} {
    %c0 = arith.constant 0 : index
    %c0_0 = arith.constant 0 : index
    %0 = vector.load %arg1[%c0, %c0_0] : memref<4x8xf32, #tpu.memory_space<vmem>>, vector<4x8xf32>
    %c0_1 = arith.constant 0 : index
    %c0_2 = arith.constant 0 : index
    %1 = vector.load %arg2[%c0_1, %c0_2] : memref<4x4xf32, #tpu.memory_space<vmem>>, vector<4x4xf32>
    %cst = arith.constant dense<0.000000e+00> : vector<4x8xf32>
    %2 = tpu.matmul %1, %0, %cst {dimension_numbers = #tpu.dot_dimension_numbers<[1], [0], [0], [1], [0, 0, 1, 1], [], []>} : vector<4x4xf32>, vector<4x8xf32>, vector<4x8xf32> -> vector<4x8xf32>
    %c0_3 = arith.constant 0 : index
    %c0_4 = arith.constant 0 : index
    %3 = vector.load %arg3[%c0_3, %c0_4] : memref<4x1xf32, #tpu.memory_space<vmem>>, vector<4x1xf32>
    %4 = vector.broadcast %3 : vector<4x1xf32> to vector<4x8xf32>
    %5 = arith.addf %2, %4 : vector<4x8xf32>
    %cst_5 = arith.constant 5.000000e-01 : f32
    %6 = vector.broadcast %cst_5 : f32 to vector<4x8xf32>
    %7 = arith.mulf %6, %5 : vector<4x8xf32>
    %8 = math.cos %7 : vector<4x8xf32>
    %cst_6 = arith.constant 5.000000e-01 : f32
    %9 = vector.broadcast %cst_6 : f32 to vector<4x8xf32>
    %10 = arith.mulf %9, %5 : vector<4x8xf32>
    %11 = math.sin %10 : vector<4x8xf32>
    %12 = tpu.iota {dimensions = array<i32: 0>} : vector<16x8xi32>
    %c3_i32 = arith.constant 3 : i32
    %13 = vector.broadcast %c3_i32 : i32 to vector<16x8xi32>
    %14 = arith.shrsi %12, %13 : vector<16x8xi32>
    %c1_i32 = arith.constant 1 : i32
    %15 = vector.broadcast %c1_i32 : i32 to vector<16x8xi32>
    %16 = arith.andi %14, %15 : vector<16x8xi32>
    %c1_i32_7 = arith.constant 1 : i32
    %17 = vector.broadcast %c1_i32_7 : i32 to vector<16x8xi32>
    %18 = arith.cmpi eq, %16, %17 : vector<16x8xi32>
    %19 = vector.extract_strided_slice %11 {offsets = [0, 0], sizes = [1, 8], strides = [1, 1]} : vector<4x8xf32> to vector<1x8xf32>
    %20 = vector.extract_strided_slice %8 {offsets = [0, 0], sizes = [1, 8], strides = [1, 1]} : vector<4x8xf32> to vector<1x8xf32>
    %21 = vector.shape_cast %19 : vector<1x8xf32> to vector<1x8xf32>
    %22 = vector.broadcast %21 : vector<1x8xf32> to vector<16x8xf32>
    %23 = vector.shape_cast %20 : vector<1x8xf32> to vector<1x8xf32>
    %24 = vector.broadcast %23 : vector<1x8xf32> to vector<16x8xf32>
    %25 = arith.select %18, %22, %24 : vector<16x8xi1>, vector<16x8xf32>
    %c2_i32 = arith.constant 2 : i32
    %26 = vector.broadcast %c2_i32 : i32 to vector<16x8xi32>
    %27 = arith.shrsi %12, %26 : vector<16x8xi32>
    %c1_i32_8 = arith.constant 1 : i32
    %28 = vector.broadcast %c1_i32_8 : i32 to vector<16x8xi32>
    %29 = arith.andi %27, %28 : vector<16x8xi32>
    %c1_i32_9 = arith.constant 1 : i32
    %30 = vector.broadcast %c1_i32_9 : i32 to vector<16x8xi32>
    %31 = arith.cmpi eq, %29, %30 : vector<16x8xi32>
    %32 = vector.extract_strided_slice %11 {offsets = [1, 0], sizes = [1, 8], strides = [1, 1]} : vector<4x8xf32> to vector<1x8xf32>
    %33 = vector.extract_strided_slice %8 {offsets = [1, 0], sizes = [1, 8], strides = [1, 1]} : vector<4x8xf32> to vector<1x8xf32>
    %34 = vector.shape_cast %32 : vector<1x8xf32> to vector<1x8xf32>
    %35 = vector.broadcast %34 : vector<1x8xf32> to vector<16x8xf32>
    %36 = vector.shape_cast %33 : vector<1x8xf32> to vector<1x8xf32>
    %37 = vector.broadcast %36 : vector<1x8xf32> to vector<16x8xf32>
    %38 = arith.select %31, %35, %37 : vector<16x8xi1>, vector<16x8xf32>
    %c1_i32_10 = arith.constant 1 : i32
    %39 = vector.broadcast %c1_i32_10 : i32 to vector<16x8xi32>
    %40 = arith.shrsi %12, %39 : vector<16x8xi32>
    %c1_i32_11 = arith.constant 1 : i32
    %41 = vector.broadcast %c1_i32_11 : i32 to vector<16x8xi32>
    %42 = arith.andi %40, %41 : vector<16x8xi32>
    %c1_i32_12 = arith.constant 1 : i32
    %43 = vector.broadcast %c1_i32_12 : i32 to vector<16x8xi32>
    %44 = arith.cmpi eq, %42, %43 : vector<16x8xi32>
    %45 = vector.extract_strided_slice %11 {offsets = [2, 0], sizes = [1, 8], strides = [1, 1]} : vector<4x8xf32> to vector<1x8xf32>
    %46 = vector.extract_strided_slice %8 {offsets = [2, 0], sizes = [1, 8], strides = [1, 1]} : vector<4x8xf32> to vector<1x8xf32>
    %47 = vector.shape_cast %45 : vector<1x8xf32> to vector<1x8xf32>
    %48 = vector.broadcast %47 : vector<1x8xf32> to vector<16x8xf32>
    %49 = vector.shape_cast %46 : vector<1x8xf32> to vector<1x8xf32>
    %50 = vector.broadcast %49 : vector<1x8xf32> to vector<16x8xf32>
    %51 = arith.select %44, %48, %50 : vector<16x8xi1>, vector<16x8xf32>
    %c0_i32 = arith.constant 0 : i32
    %52 = vector.broadcast %c0_i32 : i32 to vector<16x8xi32>
    %53 = arith.shrsi %12, %52 : vector<16x8xi32>
    %c1_i32_13 = arith.constant 1 : i32
    %54 = vector.broadcast %c1_i32_13 : i32 to vector<16x8xi32>
    %55 = arith.andi %53, %54 : vector<16x8xi32>
    %c1_i32_14 = arith.constant 1 : i32
    %56 = vector.broadcast %c1_i32_14 : i32 to vector<16x8xi32>
    %57 = arith.cmpi eq, %55, %56 : vector<16x8xi32>
    %58 = vector.extract_strided_slice %11 {offsets = [3, 0], sizes = [1, 8], strides = [1, 1]} : vector<4x8xf32> to vector<1x8xf32>
    %59 = vector.extract_strided_slice %8 {offsets = [3, 0], sizes = [1, 8], strides = [1, 1]} : vector<4x8xf32> to vector<1x8xf32>
    %60 = vector.shape_cast %58 : vector<1x8xf32> to vector<1x8xf32>
    %61 = vector.broadcast %60 : vector<1x8xf32> to vector<16x8xf32>
    %62 = vector.shape_cast %59 : vector<1x8xf32> to vector<1x8xf32>
    %63 = vector.broadcast %62 : vector<1x8xf32> to vector<16x8xf32>
    %64 = arith.select %57, %61, %63 : vector<16x8xi1>, vector<16x8xf32>
    %65 = arith.mulf %25, %38 : vector<16x8xf32>
    %66 = arith.mulf %51, %64 : vector<16x8xf32>
    %67 = arith.mulf %65, %66 : vector<16x8xf32>
    %c0_15 = arith.constant 0 : index
    %c0_16 = arith.constant 0 : index
    %68 = vector.load %arg4[%c0_15, %c0_16] : memref<16x16xf32, #tpu.memory_space<vmem>>, vector<16x16xf32>
    %cst_17 = arith.constant dense<0.000000e+00> : vector<16x8xf32>
    %69 = tpu.matmul %68, %67, %cst_17 {dimension_numbers = #tpu.dot_dimension_numbers<[1], [0], [0], [1], [0, 0, 1, 1], [], []>} : vector<16x16xf32>, vector<16x8xf32>, vector<16x8xf32> -> vector<16x8xf32>
    %70 = arith.mulf %67, %69 : vector<16x8xf32>
    %cst_18 = arith.constant dense<0.000000e+00> : vector<8xf32>
    %71 = vector.multi_reduction <add>, %70, %cst_18 [0] : vector<16x8xf32> to vector<8xf32>
    %72 = vector.shape_cast %71 : vector<8xf32> to vector<1x8xf32>
    %c0_19 = arith.constant 0 : index
    %73 = memref.load %arg5[%c0_19] : memref<1xf32, #tpu.memory_space<smem>>
    %74 = vector.broadcast %73 : f32 to vector<1x8xf32>
    %75 = arith.addf %72, %74 : vector<1x8xf32>
    %76 = tpu.iota {dimensions = array<i32: 0>} : vector<2x8xi32>
    %c0_i32_20 = arith.constant 0 : i32
    %77 = vector.broadcast %c0_i32_20 : i32 to vector<2x8xi32>
    %78 = arith.cmpi eq, %76, %77 : vector<2x8xi32>
    %cst_21 = arith.constant 1.000000e+00 : f32
    %79 = vector.broadcast %cst_21 : f32 to vector<1x8xf32>
    %80 = arith.subf %79, %75 : vector<1x8xf32>
    %81 = vector.shape_cast %75 : vector<1x8xf32> to vector<1x8xf32>
    %82 = vector.broadcast %81 : vector<1x8xf32> to vector<2x8xf32>
    %83 = vector.shape_cast %80 : vector<1x8xf32> to vector<1x8xf32>
    %84 = vector.broadcast %83 : vector<1x8xf32> to vector<2x8xf32>
    %85 = arith.select %78, %82, %84 : vector<2x8xi1>, vector<2x8xf32>
    %c0_22 = arith.constant 0 : index
    %c0_23 = arith.constant 0 : index
    %86 = vector.load %arg6[%c0_22, %c0_23] : memref<2x8xf32, #tpu.memory_space<vmem>>, vector<2x8xf32>
    tpu.vector_store %arg6[%c0_22, %c0_23], %85 {strides = array<i32>} : memref<2x8xf32, #tpu.memory_space<vmem>>, vector<2x8xf32>,
    return
  }
  func.func @transform_0(%arg0: i32) -> (i32, i32) {
    %c0_i32 = arith.constant 0 : i32
    %c0_i32_0 = arith.constant 0 : i32
    return %c0_i32, %arg0 : i32, i32
  }
  func.func @transform_1(%arg0: i32) -> (i32, i32) {
    %c0_i32 = arith.constant 0 : i32
    %c0_i32_0 = arith.constant 0 : i32
    %c0_i32_1 = arith.constant 0 : i32
    return %c0_i32, %c0_i32_0 : i32, i32
  }
  func.func @transform_2(%arg0: i32) -> (i32, i32) {
    %c0_i32 = arith.constant 0 : i32
    %c0_i32_0 = arith.constant 0 : i32
    %c0_i32_1 = arith.constant 0 : i32
    return %c0_i32, %c0_i32_0 : i32, i32
  }
  func.func @transform_3(%arg0: i32) -> (i32, i32) {
    %c0_i32 = arith.constant 0 : i32
    %c0_i32_0 = arith.constant 0 : i32
    %c0_i32_1 = arith.constant 0 : i32
    return %c0_i32, %c0_i32_0 : i32, i32
  }
  func.func @transform_4(%arg0: i32) -> i32 {
    %c0_i32 = arith.constant 0 : i32
    %c0_i32_0 = arith.constant 0 : i32
    return %c0_i32 : i32
  }
  func.func @transform_5(%arg0: i32) -> (i32, i32) {
    %c0_i32 = arith.constant 0 : i32
    %c0_i32_0 = arith.constant 0 : i32
    return %c0_i32, %arg0 : i32, i32
  }
}

</mosaic_0001>

<llo_original>
// kernel: tpu_custom_call.1
$region0: #{tpu_custom_call.1}
  #allocation0 [shape = 'u32[]', space=smem, size = 0x4, offset = 0x4, fixed_abs, tag = 'smem constant byte address 0x4 - core index']
  #allocation1 [shape = 'u32[144,128]{1,0:T(1,128)}', space=vmem, size = 0x12000, scoped, tag = 'internal scratch']
  #allocation2 [shape = 'f32[1]{0:T(128)S(6)}', space=smem, size = 0x200, scoped, tag = 'scoped memory for tpu_custom_call.1']
  %s0 = inlined_call_operand.vmem [shape: f32[4,8], index: 0, kind: input, shape index: {}]
  %s1 = inlined_call_operand.vmem [shape: f32[4,4], index: 1, kind: input, shape index: {}]
  %s2 = inlined_call_operand.vmem [shape: f32[4,1], index: 2, kind: input, shape index: {}]
  %s3 = inlined_call_operand.hbm [shape: f32[16,16], index: 3, kind: input, shape index: {}]
  %s4 = inlined_call_operand.<no memory space> [shape: f32[1], index: 4, kind: input, shape index: {}]
  %s5 = inlined_call_operand.hbm [shape: f32[2,8], index: 5, kind: output, shape index: {}]
  %s6 = sld [smem:[#allocation0]]
  $region34: #{tpu_custom_call.1} parent=0
    _
  %s8 = ssub.s32 1, %s6
  %s9 = scalar_select 0, %s8, %s6
  %10 = sst [smem:[#allocation2]] %s4
  $region1: #{tpu_custom_call.1} parent=0
    #allocation3 [shape = 'u8[8192]{0}', space=vmem, size = 0x2000, scoped, tag = 'input window, operand 3, single buffered']
    #allocation4 [shape = 's32[1]{0}', space=sflag, size = 0x4, scoped, tag = 'scoped memory for tpu_custom_call.1']
    #allocation5 [shape = 's32[1]{0}', space=sflag, size = 0x4, scoped, tag = 'scoped memory for tpu_custom_call.1']
    #allocation6 [shape = 'u8[1024]{0}', space=vmem, size = 0x400, scoped, tag = 'output window, operand 0, single buffered']
    %11 = vsyncpa [#allocation4], 0
    %12 = vsyncpa [#allocation5], 0
    // Predicated region
    $region2: #{tpu_custom_call.1} parent=1 // pred_check
      _
    $region3: #{tpu_custom_call.1} parent=1 // pred_check_branch
      %14 = sbr.rel (0) target = $region5
    $region4: #{tpu_custom_call.1} parent=1 // pred_region
      _
    $region5: #{tpu_custom_call.1} parent=1 // pred_fallthru
      _
    // Predicated region
    $region6: #{tpu_custom_call.1} parent=1 // pred_check
      _
    $region7: #{tpu_custom_call.1} parent=1 // pred_check_branch
      %16 = sbr.rel (0) target = $region9
    $region8: #{tpu_custom_call.1} parent=1 // pred_region
      _
    $region9: #{tpu_custom_call.1} parent=1 // pred_fallthru
      _
    // Predicated region
    $region10: #{tpu_custom_call.1} parent=1 // pred_check
      _
    $region11: #{tpu_custom_call.1} parent=1 // pred_check_branch
      %18 = sbr.rel (0) target = $region13
    $region12: #{tpu_custom_call.1} parent=1 // pred_region
      _
    $region13: #{tpu_custom_call.1} parent=1 // pred_fallthru
      _
    // Predicated region
    $region14: #{tpu_custom_call.1} parent=1 // pred_check
      _
    $region15: #{tpu_custom_call.1} parent=1 // pred_check_branch
      %20 = sbr.rel (0) target = $region17
    $region16: #{tpu_custom_call.1} parent=1 // pred_region
      %s22 = ssub.s32 256, 256
      %23 = vsyncadd [#allocation4], %s22
      %s24 = sshll.u32 [#allocation3], 4
      %s25 = int_to_ptr.vmem [resolvable:$true] %s24
      %30 = dma.hbm_to_vmem [thread:$0]  %s3, 256, %s25, [#allocation4], 128, 128, 8
    $region17: #{tpu_custom_call.1} parent=1 // pred_fallthru
      _
    // Predicated region
    $region18: #{tpu_custom_call.1} parent=1 // pred_check
      _
    $region19: #{tpu_custom_call.1} parent=1 // pred_check_branch
      %32 = sbr.rel (0) target = $region21
    $region20: #{tpu_custom_call.1} parent=1 // pred_region
      _
    $region21: #{tpu_custom_call.1} parent=1 // pred_fallthru
      _
    // Predicated region
    $region22: #{tpu_custom_call.1} parent=1 // pred_check
      _
    $region23: #{tpu_custom_call.1} parent=1 // pred_check_branch
      %34 = sbr.rel (0) target = $region25
    $region24: #{tpu_custom_call.1} parent=1 // pred_region
      %35 = dma.done [#allocation4], 256
    $region25: #{tpu_custom_call.1} parent=1 // pred_fallthru
      _
    %v36 = vld [vmem:[%s0] sm:$0xf]
    %v37 = vld [vmem:[%s1] sm:$0xf]
    %v38 = vld [vmem:[%s2] sm:$0xf]
    %40 = vset.pattern.permute.xlu0 0
    %41 = vperm.xlu0 %40, %v38
    %v42 = vpop.permute.xlu0 %41
    %vm44 = vcmask 31744
    %v46 = vsel %vm44, %v37, 0
    %vm48 = vcmask 1043456
    %v50 = vsel %vm48, %v36, 0
    %52 = vmatprep.subr.mxu0 0.0
    %53 = vmatpush1.msra.mxu0 0.0
    %54 = vmatprep.subr.mxu0 0.0
    %55 = vmatpush1.msra.mxu0 0.0
    %56 = vmatprep.subr.mxu0 0.0
    %57 = vmatpush1.msra.mxu0 0.0
    %58 = vmatprep.subr.mxu0 0.0
    %59 = vmatpush1.msra.mxu0 0.0
    %60 = vmatprep.subr.mxu0 0.0
    %61 = vmatpush1.msra.mxu0 0.0
    %62 = vmatprep.subr.mxu0 0.0
    %63 = vmatpush1.msra.mxu0 0.0
    %64 = vmatprep.subr.mxu0 0.0
    %65 = vmatpush1.msra.mxu0 0.0
    %66 = vmatprep.subr.mxu0 0.0
    %67 = vmatpush1.msra.mxu0 0.0
    %68 = vmatprep.subr.mxu0 0.0
    %69 = vmatpush1.msra.mxu0 0.0
    %70 = vmatprep.subr.mxu0 0.0
    %71 = vmatpush1.msra.mxu0 0.0
    %72 = vmatprep.subr.mxu0 0.0
    %73 = vmatpush1.msra.mxu0 0.0
    %74 = vmatprep.subr.mxu0 0.0
    %75 = vmatpush1.msra.mxu0 0.0
    %76 = vmatprep.subr.mxu0 0.0
    %77 = vmatpush1.msra.mxu0 0.0
    %78 = vmatprep.subr.mxu0 0.0
    %79 = vmatpush1.msra.mxu0 0.0
    %80 = vmatprep.subr.mxu0 0.0
    %81 = vmatpush1.msra.mxu0 0.0
    %82 = vmatprep.subr.mxu0 0.0
    %83 = vmatpush1.msra.mxu0 %v50
    %84 = vmatprep.subr.mxu0 0.0
    %85 = vmatpush2.msra.mxu0 0.0
    %86 = vmatprep.subr.mxu0 0.0
    %87 = vmatpush2.msra.mxu0 0.0
    %88 = vmatprep.subr.mxu0 0.0
    %89 = vmatpush2.msra.mxu0 0.0
    %90 = vmatprep.subr.mxu0 0.0
    %91 = vmatpush2.msra.mxu0 0.0
    %92 = vmatprep.subr.mxu0 0.0
    %93 = vmatpush2.msra.mxu0 0.0
    %94 = vmatprep.subr.mxu0 0.0
    %95 = vmatpush2.msra.mxu0 0.0
    %96 = vmatprep.subr.mxu0 0.0
    %97 = vmatpush2.msra.mxu0 0.0
    %98 = vmatprep.subr.mxu0 0.0
    %99 = vmatpush2.msra.mxu0 0.0
    %100 = vmatprep.subr.mxu0 0.0
    %101 = vmatpush2.msra.mxu0 0.0
    %102 = vmatprep.subr.mxu0 0.0
    %103 = vmatpush2.msra.mxu0 0.0
    %104 = vmatprep.subr.mxu0 0.0
    %105 = vmatpush2.msra.mxu0 0.0
    %106 = vmatprep.subr.mxu0 0.0
    %107 = vmatpush2.msra.mxu0 0.0
    %108 = vmatprep.subr.mxu0 0.0
    %109 = vmatpush2.msra.mxu0 0.0
    %110 = vmatprep.subr.mxu0 0.0
    %111 = vmatpush2.msra.mxu0 0.0
    %112 = vmatprep.subr.mxu0 0.0
    %113 = vmatpush2.msra.mxu0 0.0
    %114 = vmatprep.subr.mxu0 0.0
    %115 = vmatpush2.msra.mxu0 0.0
    %116 = vmatprep.mubr.f32.mxu0 0.0
    %117 = vmatmul.mubr.f32.gmra.mxu0 %v46
    %v118 = vpop.f32.mrf.mxu0
    %v119 = vadd.f32 %v42, %v118
    %v120 = vpop.f32.mrf.mxu0
    %121 = vdwg.mxu0
    %v122 = vmul.f32 %v119, 0.5
    %v123 = vand.u32 2147483647, %v122
    %vm124 = vcmp.le.f32.partialorder %v123, 0.7853982
    %vm125 = vcmp.lt.s32.totalorder %v122, 0
    %v126 = vand.u32 %v122, 2139095040
    %v127 = vshrl.u32 %v126, 23
    %v128 = vsub.s32 %v127, 127
    %v129 = vand.u32 2147483647, %v122
    %v130 = vand.u32 %v129, 8388607
    %v131 = vor.u32 %v130, 8388608
    %v132 = vsub.s32 0, %v131
    %v133 = vadd.s32 %v128, 1
    %vm134 = vcmp.gt.s32.totalorder %v133, 0
    %v135 = vsel %vm134, %v133, 0
    %v136 = vshrl.u32 %v135, 5
    %v137 = vand.u32 %v135, 31
    %v138 = vsub.s32 32, %v137
    %v139 = vshrl.u32 683565275, %v138
    %v140 = vshll.u32 683565275, %v137
    %v141 = vshrl.u32 2475754826, %v138
    %v142 = vor.u32 %v140, %v141
    %v143 = vshll.u32 2475754826, %v137
    %v144 = vshrl.u32 2131351028, %v138
    %v145 = vor.u32 %v143, %v144
    %v146 = vshll.u32 2131351028, %v137
    %v147 = vshrl.u32 2102212464, %v138
    %v148 = vor.u32 %v146, %v147
    %v149 = vshll.u32 2102212464, %v137
    %v150 = vshrl.u32 920167782, %v138
    %v151 = vor.u32 %v149, %v150
    %v152 = vshll.u32 920167782, %v137
    %v153 = vshrl.u32 1326507024, %v138
    %v154 = vor.u32 %v152, %v153
    %vm155 = vcmp.lt.s32.totalorder %v136, 1
    %vm156 = vcmp.lt.s32.totalorder %v136, 2
    %vm157 = vcmp.lt.s32.totalorder %v136, 3
    %vm158 = vcmp.lt.s32.totalorder %v136, 4
    %v159 = vsel %vm155, %v139, %v142
    %v160 = vsel %vm158, %v148, 2102212464
    %v161 = vsel %vm157, %v145, %v160
    %v162 = vsel %vm156, %v159, %v161
    %v163 = vsel %vm155, %v142, %v145
    %v164 = vsel %vm158, %v151, 920167782
    %v165 = vsel %vm157, %v148, %v164
    %v166 = vsel %vm156, %v163, %v165
    %v167 = vsel %vm155, %v145, %v148
    %v168 = vsel %vm158, %v154, 1326507024
    %v169 = vsel %vm157, %v151, %v168
    %v170 = vsel %vm156, %v167, %v169
    %v171 = vshll.u32 %v131, 8
    %v172 = vmul.u32.u64.compose %v171, %v170
    %v173 = vextract.low.u32 %v172
    %v174 = vextract.high.u32 %v172
    %v175 = vmul.u32.u64.compose %v171, %v166
    %v176 = vextract.low.u32 %v175
    %v177 = vextract.high.u32 %v175
    %v178 = vmul.u32 %v171, %v162
    %v179 = vadd.s32 %v174, %v176
    %vm180 = vc.u32 %v174, %v176
    %v181 = vadd.s32 %v177, 1
    %v182 = vsel %vm180, %v181, %v177
    %v183 = vadd.s32 %v178, %v182
    %v184 = vadd.s32 %v183, 536870912
    %v185 = vshrl.u32 %v184, 30
    %v186 = vshll.u32 %v185, 30
    %v187 = vsub.s32 %v183, %v186
    %vm188 = vcmp.lt.s32.totalorder %v187, 0
    %v189 = vsub.s32 0, %v187
    %v190 = vsel %vm188, %v189, %v187
    %v191 = vclz %v190
    %v192 = vsub.s32 %v191, 2
    %vm193 = vcmp.gt.s32.totalorder 0, %v192
    %v194 = vsel %vm193, 0, %v192
    %v195 = vsub.s32 32, %v194
    %v196 = vshll.u32 %v187, %v194
    %v197 = vshrl.u32 %v179, %v195
    %v198 = vor.u32 %v196, %v197
    %v199 = vsub.s32 4294967266, %v194
    %v200 = vadd.s32 %v199, 127
    %v201 = vshll.u32 %v200, 23
    %v202 = vor.u32 4788187, %v201
    %v203 = vand.u32 2147483647, %v202
    %v205 = vcvt.s32.f32 %v198
    %v206 = vmul.f32 %v205, %v203
    %v207 = vxor.u32 %v206, 2147483648
    %v208 = vsel %vm125, %v207, %v206
    %v209 = vsub.s32 4, %v185
    %v210 = vsel %vm125, %v209, %v185
    %v211 = vsel %vm124, %v122, %v208
    %v212 = vsel %vm124, 0, %v210
    %v213 = vcosq.f32.pop %v211
    %v214 = vsinq.f32.pop %v211
    %vm215 = vweird.f32 %v122
    %v216 = vand.u32 %v212, 3
    %vm217 = vcmp.lt.s32.totalorder %v216, 2
    %vm218 = vcmp.eq.s32.totalorder %v216, 0
    %v219 = vxor.u32 %v214, 2147483648
    %v220 = vsel %vm218, %v213, %v219
    %vm221 = vcmp.eq.s32.totalorder %v216, 2
    %v222 = vxor.u32 %v213, 2147483648
    %v223 = vsel %vm221, %v222, %v214
    %v224 = vsel %vm217, %v220, %v223
    %v225 = vsel %vm215, nan, %v224
    %v226 = vand.u32 2147483647, %v122
    %vm227 = vcmp.le.f32.partialorder %v226, 0.7853982
    %vm228 = vcmp.lt.s32.totalorder %v122, 0
    %v229 = vand.u32 %v122, 2139095040
    %v230 = vshrl.u32 %v229, 23
    %v231 = vsub.s32 %v230, 127
    %v232 = vand.u32 2147483647, %v122
    %v233 = vand.u32 %v232, 8388607
    %v234 = vor.u32 %v233, 8388608
    %v235 = vsub.s32 0, %v234
    %v236 = vadd.s32 %v231, 1
    %vm237 = vcmp.gt.s32.totalorder %v236, 0
    %v238 = vsel %vm237, %v236, 0
    %v239 = vshrl.u32 %v238, 5
    %v240 = vand.u32 %v238, 31
    %v241 = vsub.s32 32, %v240
    %v242 = vshrl.u32 683565275, %v241
    %v243 = vshll.u32 683565275, %v240
    %v244 = vshrl.u32 2475754826, %v241
    %v245 = vor.u32 %v243, %v244
    %v246 = vshll.u32 2475754826, %v240
    %v247 = vshrl.u32 2131351028, %v241
    %v248 = vor.u32 %v246, %v247
    %v249 = vshll.u32 2131351028, %v240
    %v250 = vshrl.u32 2102212464, %v241
    %v251 = vor.u32 %v249, %v250
    %v252 = vshll.u32 2102212464, %v240
    %v253 = vshrl.u32 920167782, %v241
    %v254 = vor.u32 %v252, %v253
    %v255 = vshll.u32 920167782, %v240
    %v256 = vshrl.u32 1326507024, %v241
    %v257 = vor.u32 %v255, %v256
    %vm258 = vcmp.lt.s32.totalorder %v239, 1
    %vm259 = vcmp.lt.s32.totalorder %v239, 2
    %vm260 = vcmp.lt.s32.totalorder %v239, 3
    %vm261 = vcmp.lt.s32.totalorder %v239, 4
    %v262 = vsel %vm258, %v242, %v245
    %v263 = vsel %vm261, %v251, 2102212464
    %v264 = vsel %vm260, %v248, %v263
    %v265 = vsel %vm259, %v262, %v264
    %v266 = vsel %vm258, %v245, %v248
    %v267 = vsel %vm261, %v254, 920167782
    %v268 = vsel %vm260, %v251, %v267
    %v269 = vsel %vm259, %v266, %v268
    %v270 = vsel %vm258, %v248, %v251
    %v271 = vsel %vm261, %v257, 1326507024
    %v272 = vsel %vm260, %v254, %v271
    %v273 = vsel %vm259, %v270, %v272
    %v274 = vshll.u32 %v234, 8
    %v275 = vmul.u32.u64.compose %v274, %v273
    %v276 = vextract.low.u32 %v275
    %v277 = vextract.high.u32 %v275
    %v278 = vmul.u32.u64.compose %v274, %v269
    %v279 = vextract.low.u32 %v278
    %v280 = vextract.high.u32 %v278
    %v281 = vmul.u32 %v274, %v265
    %v282 = vadd.s32 %v277, %v279
    %vm283 = vc.u32 %v277, %v279
    %v284 = vadd.s32 %v280, 1
    %v285 = vsel %vm283, %v284, %v280
    %v286 = vadd.s32 %v281, %v285
    %v287 = vadd.s32 %v286, 536870912
    %v288 = vshrl.u32 %v287, 30
    %v289 = vshll.u32 %v288, 30
    %v290 = vsub.s32 %v286, %v289
    %vm291 = vcmp.lt.s32.totalorder %v290, 0
    %v292 = vsub.s32 0, %v290
    %v293 = vsel %vm291, %v292, %v290
    %v294 = vclz %v293
    %v295 = vsub.s32 %v294, 2
    %vm296 = vcmp.gt.s32.totalorder 0, %v295
    %v297 = vsel %vm296, 0, %v295
    %v298 = vsub.s32 32, %v297
    %v299 = vshll.u32 %v290, %v297
    %v300 = vshrl.u32 %v282, %v298
    %v301 = vor.u32 %v299, %v300
    %v302 = vsub.s32 4294967266, %v297
    %v303 = vadd.s32 %v302, 127
    %v304 = vshll.u32 %v303, 23
    %v305 = vor.u32 4788187, %v304
    %v306 = vand.u32 2147483647, %v305
    %v308 = vcvt.s32.f32 %v301
    %v309 = vmul.f32 %v308, %v306
    %v310 = vxor.u32 %v309, 2147483648
    %v311 = vsel %vm228, %v310, %v309
    %v312 = vsub.s32 4, %v288
    %v313 = vsel %vm228, %v312, %v288
    %v314 = vsel %vm227, %v122, %v311
    %v315 = vsel %vm227, 0, %v313
    %v316 = vcosq.f32.pop %v314
    %v317 = vsinq.f32.pop %v314
    %vm318 = vweird.f32 %v122
    %v319 = vadd.s32 %v315, 3
    %v320 = vand.u32 %v319, 3
    %vm321 = vcmp.lt.s32.totalorder %v320, 2
    %vm322 = vcmp.eq.s32.totalorder %v320, 0
    %v323 = vxor.u32 %v317, 2147483648
    %v324 = vsel %vm322, %v316, %v323
    %vm325 = vcmp.eq.s32.totalorder %v320, 2
    %v326 = vxor.u32 %v316, 2147483648
    %v327 = vsel %vm325, %v326, %v317
    %v328 = vsel %vm321, %v324, %v327
    %v329 = vsel %vm318, nan, %v328
    %v330 = vlaneseq
    %v331 = vshrl.u32 %v330, 7
    %v332 = vadd.s32 %v331, 8
    %v333 = vshra.s32 %v331, 3
    %v334 = vshra.s32 %v332, 3
    %v335 = vand.u32 %v333, 1
    %v336 = vand.u32 %v334, 1
    %vm337 = vcmp.eq.s32.totalorder %v335, 1
    %vm338 = vcmp.eq.s32.totalorder %v336, 1
    %v339 = vlaneseq
    %v340 = vshrl.u32 %v339, 7
    %v341 = vsub.s32 0, %v340
    %v342 = vrot.slane %v329, %v341
    %v343 = vlaneseq
    %v344 = vshrl.u32 %v343, 7
    %v345 = vsub.s32 0, %v344
    %v346 = vrot.slane %v225, %v345
    %v347 = vsel %vm337, %v342, %v346
    %v348 = vsel %vm338, %v342, %v346
    %v349 = vshra.s32 %v331, 2
    %v350 = vshra.s32 %v332, 2
    %v351 = vand.u32 %v349, 1
    %v352 = vand.u32 %v350, 1
    %vm353 = vcmp.eq.s32.totalorder %v351, 1
    %vm354 = vcmp.eq.s32.totalorder %v352, 1
    %v355 = vlaneseq
    %v356 = vshrl.u32 %v355, 7
    %v357 = vsub.s32 1, %v356
    %v358 = vrot.slane %v329, %v357
    %v359 = vlaneseq
    %v360 = vshrl.u32 %v359, 7
    %v361 = vsub.s32 1, %v360
    %v362 = vrot.slane %v225, %v361
    %v363 = vsel %vm353, %v358, %v362
    %v364 = vsel %vm354, %v358, %v362
    %v365 = vshra.s32 %v331, 1
    %v366 = vshra.s32 %v332, 1
    %v367 = vand.u32 %v365, 1
    %v368 = vand.u32 %v366, 1
    %vm369 = vcmp.eq.s32.totalorder %v367, 1
    %vm370 = vcmp.eq.s32.totalorder %v368, 1
    %v371 = vlaneseq
    %v372 = vshrl.u32 %v371, 7
    %v373 = vsub.s32 2, %v372
    %v374 = vrot.slane %v329, %v373
    %v375 = vlaneseq
    %v376 = vshrl.u32 %v375, 7
    %v377 = vsub.s32 2, %v376
    %v378 = vrot.slane %v225, %v377
    %v379 = vsel %vm369, %v374, %v378
    %v380 = vsel %vm370, %v374, %v378
    %v381 = vand.u32 %v331, 1
    %v382 = vand.u32 %v332, 1
    %vm383 = vcmp.eq.s32.totalorder %v381, 1
    %vm384 = vcmp.eq.s32.totalorder %v382, 1
    %v385 = vlaneseq
    %v386 = vshrl.u32 %v385, 7
    %v387 = vsub.s32 3, %v386
    %v388 = vrot.slane %v329, %v387
    %v389 = vlaneseq
    %v390 = vshrl.u32 %v389, 7
    %v391 = vsub.s32 3, %v390
    %v392 = vrot.slane %v225, %v391
    %v393 = vsel %vm383, %v388, %v392
    %v394 = vsel %vm384, %v388, %v392
    %v395 = vmul.f32 %v347, %v363
    %v396 = vmul.f32 %v348, %v364
    %v397 = vmul.f32 %v379, %v393
    %v398 = vmul.f32 %v380, %v394
    %v399 = vmul.f32 %v395, %v397
    %v400 = vmul.f32 %v396, %v398
    %v401 = vld [vmem:[#allocation3] sm:$0xff]
    %v402 = vld [vmem:[#allocation3 + $0x8] sm:$0xff]
    %vm403 = vcmask 130048
    %v405 = vsel %vm403, %v401, 0
    %v408 = vsel %vm403, %v402, 0
    %410 = vmatprep.subr.mxu0 0.0
    %411 = vmatpush1.msra.mxu0 0.0
    %412 = vmatprep.subr.mxu0 0.0
    %413 = vmatpush1.msra.mxu0 0.0
    %414 = vmatprep.subr.mxu0 0.0
    %415 = vmatpush1.msra.mxu0 0.0
    %416 = vmatprep.subr.mxu0 0.0
    %417 = vmatpush1.msra.mxu0 0.0
    %418 = vmatprep.subr.mxu0 0.0
    %419 = vmatpush1.msra.mxu0 0.0
    %420 = vmatprep.subr.mxu0 0.0
    %421 = vmatpush1.msra.mxu0 0.0
    %422 = vmatprep.subr.mxu0 0.0
    %423 = vmatpush1.msra.mxu0 0.0
    %424 = vmatprep.subr.mxu0 0.0
    %425 = vmatpush1.msra.mxu0 0.0
    %426 = vmatprep.subr.mxu0 0.0
    %427 = vmatpush1.msra.mxu0 0.0
    %428 = vmatprep.subr.mxu0 0.0
    %429 = vmatpush1.msra.mxu0 0.0
    %430 = vmatprep.subr.mxu0 0.0
    %431 = vmatpush1.msra.mxu0 0.0
    %432 = vmatprep.subr.mxu0 0.0
    %433 = vmatpush1.msra.mxu0 0.0
    %434 = vmatprep.subr.mxu0 0.0
    %435 = vmatpush1.msra.mxu0 0.0
    %436 = vmatprep.subr.mxu0 0.0
    %437 = vmatpush1.msra.mxu0 0.0
    %438 = vmatprep.subr.mxu0 0.0
    %439 = vmatpush1.msra.mxu0 %v400
    %440 = vmatprep.subr.mxu0 0.0
    %441 = vmatpush1.msra.mxu0 %v399
    %442 = vmatprep.subr.mxu0 0.0
    %443 = vmatpush2.msra.mxu0 0.0
    %444 = vmatprep.subr.mxu0 0.0
    %445 = vmatpush2.msra.mxu0 0.0
    %446 = vmatprep.subr.mxu0 0.0
    %447 = vmatpush2.msra.mxu0 0.0
    %448 = vmatprep.subr.mxu0 0.0
    %449 = vmatpush2.msra.mxu0 0.0
    %450 = vmatprep.subr.mxu0 0.0
    %451 = vmatpush2.msra.mxu0 0.0
    %452 = vmatprep.subr.mxu0 0.0
    %453 = vmatpush2.msra.mxu0 0.0
    %454 = vmatprep.subr.mxu0 0.0
    %455 = vmatpush2.msra.mxu0 0.0
    %456 = vmatprep.subr.mxu0 0.0
    %457 = vmatpush2.msra.mxu0 0.0
    %458 = vmatprep.subr.mxu0 0.0
    %459 = vmatpush2.msra.mxu0 0.0
    %460 = vmatprep.subr.mxu0 0.0
    %461 = vmatpush2.msra.mxu0 0.0
    %462 = vmatprep.subr.mxu0 0.0
    %463 = vmatpush2.msra.mxu0 0.0
    %464 = vmatprep.subr.mxu0 0.0
    %465 = vmatpush2.msra.mxu0 0.0
    %466 = vmatprep.subr.mxu0 0.0
    %467 = vmatpush2.msra.mxu0 0.0
    %468 = vmatprep.subr.mxu0 0.0
    %469 = vmatpush2.msra.mxu0 0.0
    %470 = vmatprep.subr.mxu0 0.0
    %471 = vmatpush2.msra.mxu0 0.0
    %472 = vmatprep.subr.mxu0 0.0
    %473 = vmatpush2.msra.mxu0 0.0
    %474 = vmatprep.mubr.f32.mxu0 0.0
    %475 = vmatmul.mubr.f32.gmra.mxu0 %v405
    %v476 = vpop.f32.mrf.mxu0
    %v477 = vadd.f32 0.0, %v476
    %v478 = vpop.f32.mrf.mxu0
    %479 = vmatprep.mubr.f32.mxu0 0.0
    %480 = vmatmul.mubr.f32.gmra.mxu0 %v408
    %v481 = vpop.f32.mrf.mxu0
    %v482 = vadd.f32 0.0, %v481
    %v483 = vpop.f32.mrf.mxu0
    %484 = vdwg.mxu0
    %v485 = vmul.f32 %v399, %v477
    %v486 = vmul.f32 %v400, %v482
    %vm487 = vcmask 64512
    %v488 = vsel %vm487, %v485, 0.0
    %v489 = vsel %vm487, %v486, 0.0
    %v490 = vadd.f32 %v488, %v489
    %v491 = vrot.slane %v490, 4
    %v492 = vadd.f32 %v490, %v491
    %v493 = vrot.slane %v492, 2
    %v494 = vadd.f32 %v492, %v493
    %v495 = vrot.slane %v494, 1
    %v496 = vadd.f32 %v494, %v495
    %s497 = sld [smem:[#allocation2]]
    %v498 = vstv %s497
    %v499 = vadd.f32 %v496, %v498
    %vm500 = vcmp.eq.s32.totalorder %v331, 0
    %v501 = vsub.f32 1.0, %v499
    %v502 = vsel %vm500, %v499, %v501
    %vm503 = vcmask 58368
    %504 = vst.msk [vmem:[#allocation6] sm:$0x3] %vm503, %v502
    // Predicated region
    $region26: #{tpu_custom_call.1} parent=1 // pred_check
      _
    $region27: #{tpu_custom_call.1} parent=1 // pred_check_branch
      %506 = sbr.rel (0) target = $region29
    $region28: #{tpu_custom_call.1} parent=1 // pred_region
      %s508 = ssub.s32 32, 32
      %509 = vsyncadd [#allocation5], %s508
      %s511 = sshll.u32 [#allocation6], 4
      %s512 = int_to_ptr.vmem [resolvable:$true] %s511
      %514 = dma.vmem_to_hbm [thread:$0]  %s512, 32, %s5, [#allocation5]
    $region29: #{tpu_custom_call.1} parent=1 // pred_fallthru
      _
    // Predicated region
    $region30: #{tpu_custom_call.1} parent=1 // pred_check
      _
    $region31: #{tpu_custom_call.1} parent=1 // pred_check_branch
      %516 = sbr.rel (0) target = $region33
    $region32: #{tpu_custom_call.1} parent=1 // pred_region
      %517 = dma.done [#allocation5], 32
    $region33: #{tpu_custom_call.1} parent=1 // pred_fallthru
      _
    %518 = vsyncpa [#allocation4], 1
    %519 = vsyncpa [#allocation5], 1

</llo_original>
